<compile_context>
chip_gen: v6e
topology: v6e:2x2x1
jax: 0.10.0
libtpu: 0.0.40
codegen_flags: <defaults>
</compile_context>

<pallas_src>
import functools

import jax
import jax.numpy as jnp
from jax import lax
from jax.experimental import pallas as pl
from jax.experimental.pallas import tpu as pltpu


_MXU_LANE = 128
# Conservative VMEM budget: stays under the 16 MiB scoped default on v5e
# (32 MiB on v6e/v7x), so no vmem_limit_bytes override / per-chip retuning.
_VMEM_BUDGET_BYTES = 12 * 1024 * 1024


# ----------------------------- helpers ---------------------------------------

def _round_up(x, m):
    return ((x + m - 1) // m) * m


def _pad_and_tile(c, hw, dtype_bytes):
    """Padded channel dim, padded HW dim, and K-tile size along HW."""
    cp = _round_up(max(c, 8), _MXU_LANE)          # lane-dense (Cp, Cp) output
    # fixed VMEM: f32 accumulator + (double-buffered) f32 target / G output
    fixed = 3 * cp * cp * 4
    per_col = 2 * cp * dtype_bytes                # double-buffered X slab, per column
    tk_cap = max(_MXU_LANE,
                 ((_VMEM_BUDGET_BYTES - fixed) // max(per_col, 1))
                 // _MXU_LANE * _MXU_LANE)
    hw128 = _round_up(hw, _MXU_LANE)
    if hw128 <= tk_cap:
        tk, hwp = hw128, hw128                    # single reduction step
    else:
        tk = tk_cap
        hwp = _round_up(hw, tk)
    return cp, hwp, tk


def _padded_x(feature_nchw, cp, hwp):
    """(1, C, H, W) -> zero-padded (Cp, HWp), preserving the input dtype."""
    n, c, h, w = feature_nchw.shape
    assert n == 1, "gram_matrix (PyTorch .view(c, h*w)) requires batch == 1"
    x = feature_nchw.reshape(c, h * w)
    return jnp.pad(x, ((0, cp - c), (0, hwp - h * w)))


# ----------------------------- kernels ---------------------------------------

def _gram_kernel(x_ref, g_ref, acc_ref):
    """Accumulate G += X_k . X_k^T over the tiled HW (contraction) axis."""
    k = pl.program_id(0)

    @pl.when(k == 0)
    def _():
        acc_ref[...] = jnp.zeros_like(acc_ref)

    x = x_ref[...]                                           # (Cp, TK)
    # Contract the last dim of both operands: no transposed copy of the slab.
    acc_ref[...] += lax.dot_general(
        x, x, dimension_numbers=(((1,), (1,)), ((), ())),
        preferred_element_type=jnp.float32)

    @pl.when(k == pl.num_programs(0) - 1)
    def _():
        g_ref[...] = acc_ref[...]


def _style_loss_kernel(x_ref, tgt_ref, loss_ref, acc_ref, *, inv_count):
    """Fused: G = X @ X^T (tiled over HW); loss = sum((G - target)^2) / (C*C)."""
    k = pl.program_id(0)

    @pl.when(k == 0)
    def _():
        acc_ref[...] = jnp.zeros_like(acc_ref)

    x = x_ref[...]                                           # (Cp, TK)
    acc_ref[...] += lax.dot_general(
        x, x, dimension_numbers=(((1,), (1,)), ((), ())),
        preferred_element_type=jnp.float32)

    @pl.when(k == pl.num_programs(0) - 1)
    def _():
        diff = acc_ref[...] - tgt_ref[...]                   # padded region is 0-0
        loss_ref[0, 0] = jnp.sum(diff * diff) * inv_count


# ----------------------------- wrappers ---------------------------------------

def _gram_padded(feature_nchw):
    """Zero-padded (Cp, Cp) float32 gram of a (1, C, H, W) feature map."""
    n, c, h, w = feature_nchw.shape
    hw = h * w
    dtype_bytes = jnp.dtype(feature_nchw.dtype).itemsize
    cp, hwp, tk = _pad_and_tile(c, hw, dtype_bytes)
    x = _padded_x(feature_nchw, cp, hwp)

    g = pl.pallas_call(
        _gram_kernel,
        out_shape=jax.ShapeDtypeStruct((cp, cp), jnp.float32),
        grid_spec=pltpu.PrefetchScalarGridSpec(
            num_scalar_prefetch=0,
            grid=(hwp // tk,),
            in_specs=[pl.BlockSpec((cp, tk), lambda k: (0, k))],
            out_specs=pl.BlockSpec((cp, cp), lambda k: (0, 0)),
            scratch_shapes=[pltpu.VMEM((cp, cp), jnp.float32)],
        ),
        compiler_params=pltpu.CompilerParams(
            dimension_semantics=("arbitrary",)),
    )(x)
    return g, cp


def gram_matrix(feature_nchw):
    """Pallas gram matrix of a (1, C, H, W) feature map -> (C, C) float32."""
    _, c, _, _ = feature_nchw.shape
    g, _ = _gram_padded(feature_nchw)
    return g[:c, :c]


class StyleLoss:
    """JAX/Pallas port of the PyTorch StyleLoss module."""

    def __init__(self, target_feature):
        # target gram is computed once (detached) at construction time;
        # kept zero-padded to (Cp, Cp) so forward() can use it directly.
        _, c, _, _ = target_feature.shape
        self._c = c
        self.target_padded, self._cp = _gram_padded(target_feature)
        self.target = self.target_padded[:c, :c]             # (C, C), API parity

    def forward(self, input_nchw):
        n, c, h, w = input_nchw.shape
        assert n == 1, "StyleLoss forward requires batch == 1"
        assert c == self._c, "channel count must match the target feature"
        hw = h * w
        dtype_bytes = jnp.dtype(input_nchw.dtype).itemsize
        cp, hwp, tk = _pad_and_tile(c, hw, dtype_bytes)
        assert cp == self._cp
        x = _padded_x(input_nchw, cp, hwp)

        loss = pl.pallas_call(
            functools.partial(_style_loss_kernel, inv_count=1.0 / float(c * c)),
            out_shape=jax.ShapeDtypeStruct((1, 1), jnp.float32),
            grid_spec=pltpu.PrefetchScalarGridSpec(
                num_scalar_prefetch=0,
                grid=(hwp // tk,),
                in_specs=[
                    pl.BlockSpec((cp, tk), lambda k: (0, k)),     # X K-slabs
                    pl.BlockSpec((cp, cp), lambda k: (0, 0)),     # target (resident)
                ],
                out_specs=pl.BlockSpec(memory_space=pltpu.MemorySpace.SMEM),
                scratch_shapes=[pltpu.VMEM((cp, cp), jnp.float32)],
            ),
            compiler_params=pltpu.CompilerParams(
                dimension_semantics=("arbitrary",)),
        )(x, self.target_padded)

        self.loss = loss[0, 0]
        # PyTorch forward returns the input unchanged (transparent loss layer).
        return input_nchw


# ----------------------------- demo / check -----------------------------------

if __name__ == "__main__":
    key = jax.random.PRNGKey(0)
    k_tgt, k_in = jax.random.split(key)

    # batch must be 1 per the PyTorch .view(c, h*w) contract.
    C, H, W = 4, 16, 16
    target_feature = jax.random.normal(k_tgt, (1, C, H, W), dtype=jnp.float32)
    input_feature = jax.random.normal(k_in, (1, C, H, W), dtype=jnp.float32)

    module = StyleLoss(target_feature)
    out = module.forward(input_feature)

    out = jax.block_until_ready(out)
    loss = jax.block_until_ready(module.loss)

    # Pure-JAX reference check.
    def ref_gram(t):
        _, c, h, w = t.shape
        x = t.reshape(c, h * w)
        return x @ x.T

    g_ref = ref_gram(input_feature)
    t_ref = ref_gram(target_feature)
    loss_ref = jnp.mean((g_ref - t_ref) ** 2)

    assert out.shape == input_feature.shape
    assert jnp.allclose(out, input_feature)
    assert jnp.allclose(module.target, t_ref, rtol=1e-5, atol=1e-5)
    assert jnp.allclose(loss, loss_ref, rtol=1e-5, atol=1e-5), (loss, loss_ref)

    print("KERNEL_OK")
</pallas_src>

<mosaic_0001>
module attributes {stable_mosaic.version = 11 : i64} {
  func.func @_gram_kernel(%arg0: i32, %arg1: memref<128x256xf32, #tpu.memory_space<vmem>>, %arg2: memref<128x128xf32, #tpu.memory_space<vmem>>, %arg3: memref<128x128xf32, #tpu.memory_space<vmem>>) attributes {dimension_semantics = [#tpu.dimension_semantics<arbitrary>], iteration_bounds = array<i64: 1>, scalar_prefetch = 0 : i64, scratch_operands = 1 : i64, tpu.core_type = #tpu.core_type<tc>, window_params = [{transform_indices = @transform_0, window_bounds = array<i64: 128, 256>}, {pipeline_mode = #tpu.pipeline_mode<synchronous>, transform_indices = @transform_1, window_bounds = array<i64: 128, 128>}]} {
    %c0_i32 = arith.constant 0 : i32
    %0 = arith.cmpi eq, %arg0, %c0_i32 : i32
    %1 = arith.extui %0 : i1 to i32
    %c0_i32_0 = arith.constant 0 : i32
    %2 = arith.cmpi ne, %1, %c0_i32_0 : i32
    scf.if %2 {
      %cst_8 = arith.constant 0.000000e+00 : f32
      %11 = vector.broadcast %cst_8 : f32 to vector<128x128xf32>
      %c0_9 = arith.constant 0 : index
      %c0_10 = arith.constant 0 : index
      %12 = vector.load %arg3[%c0_9, %c0_10] : memref<128x128xf32, #tpu.memory_space<vmem>>, vector<128x128xf32>
      tpu.vector_store %arg3[%c0_9, %c0_10], %11 {strides = array<i32>} : memref<128x128xf32, #tpu.memory_space<vmem>>, vector<128x128xf32>,
    } else {
    }
    %c0 = arith.constant 0 : index
    %c0_1 = arith.constant 0 : index
    %3 = vector.load %arg1[%c0, %c0_1] : memref<128x256xf32, #tpu.memory_space<vmem>>, vector<128x256xf32>
    %c0_2 = arith.constant 0 : index
    %c0_3 = arith.constant 0 : index
    %4 = vector.load %arg3[%c0_2, %c0_3] : memref<128x128xf32, #tpu.memory_space<vmem>>, vector<128x128xf32>
    %cst = arith.constant dense<0.000000e+00> : vector<128x128xf32>
    %5 = tpu.matmul %3, %3, %cst {dimension_numbers = #tpu.dot_dimension_numbers<[1], [1], [0], [0], [0, 0, 1, 0], [], []>} : vector<128x256xf32>, vector<128x256xf32>, vector<128x128xf32> -> vector<128x128xf32>
    %6 = arith.addf %4, %5 : vector<128x128xf32>
    %c0_4 = arith.constant 0 : index
    %c0_5 = arith.constant 0 : index
    %7 = vector.load %arg3[%c0_4, %c0_5] : memref<128x128xf32, #tpu.memory_space<vmem>>, vector<128x128xf32>
    tpu.vector_store %arg3[%c0_4, %c0_5], %6 {strides = array<i32>} : memref<128x128xf32, #tpu.memory_space<vmem>>, vector<128x128xf32>,
    %c0_i32_6 = arith.constant 0 : i32
    %8 = arith.cmpi eq, %arg0, %c0_i32_6 : i32
    %9 = arith.extui %8 : i1 to i32
    %c0_i32_7 = arith.constant 0 : i32
    %10 = arith.cmpi ne, %9, %c0_i32_7 : i32
    scf.if %10 {
      %c0_8 = arith.constant 0 : index
      %c0_9 = arith.constant 0 : index
      %11 = vector.load %arg3[%c0_8, %c0_9] : memref<128x128xf32, #tpu.memory_space<vmem>>, vector<128x128xf32>
      %c0_10 = arith.constant 0 : index
      %c0_11 = arith.constant 0 : index
      %12 = vector.load %arg2[%c0_10, %c0_11] : memref<128x128xf32, #tpu.memory_space<vmem>>, vector<128x128xf32>
      tpu.vector_store %arg2[%c0_10, %c0_11], %11 {strides = array<i32>} : memref<128x128xf32, #tpu.memory_space<vmem>>, vector<128x128xf32>,
    } else {
    }
    return
  }
  func.func @transform_0(%arg0: i32) -> (i32, i32) {
    %c0_i32 = arith.constant 0 : i32
    %c0_i32_0 = arith.constant 0 : i32
    return %c0_i32, %arg0 : i32, i32
  }
  func.func @transform_1(%arg0: i32) -> (i32, i32) {
    %c0_i32 = arith.constant 0 : i32
    %c0_i32_0 = arith.constant 0 : i32
    %c0_i32_1 = arith.constant 0 : i32
    return %c0_i32, %c0_i32_0 : i32, i32
  }
}

</mosaic_0001>

<llo_original>
// kernel: tpu_custom_call.1
$region0: #{tpu_custom_call.1}
  #allocation0 [shape = 'u32[]', space=smem, size = 0x4, offset = 0x4, fixed_abs, tag = 'smem constant byte address 0x4 - core index']
  #allocation1 [shape = 'u32[144,128]{1,0:T(1,128)}', space=vmem, size = 0x12000, scoped, tag = 'internal scratch']
  #allocation2 [shape = 'f32[128,128]{1,0:T(8,128)}', space=vmem, size = 0x10000, scoped, tag = 'scratch operand']
  %s0 = inlined_call_operand.hbm [shape: f32[128,256], index: 0, kind: input, shape index: {}]
  %s1 = inlined_call_operand.hbm [shape: f32[128,128], index: 1, kind: output, shape index: {}]
  %s2 = sld [smem:[#allocation0]]
  $region26: #{tpu_custom_call.1} parent=0
    _
  %s4 = ssub.s32 1, %s2
  %s5 = scalar_select 0, %s4, %s2
  $region1: #{tpu_custom_call.1} parent=0
    #allocation3 [shape = 'u8[131072]{0}', space=vmem, size = 0x20000, scoped, tag = 'input window, operand 0, single buffered']
    #allocation4 [shape = 's32[1]{0}', space=sflag, size = 0x4, scoped, tag = 'scoped memory for tpu_custom_call.1']
    #allocation5 [shape = 's32[1]{0}', space=sflag, size = 0x4, scoped, tag = 'scoped memory for tpu_custom_call.1']
    #allocation6 [shape = 'u8[65536]{0}', space=vmem, size = 0x10000, scoped, tag = 'output window, operand 0, single buffered']
    %6 = vsyncpa [#allocation4], 0
    %7 = vsyncpa [#allocation5], 0
    // Predicated region
    $region2: #{tpu_custom_call.1} parent=1 // pred_check
      _
    $region3: #{tpu_custom_call.1} parent=1 // pred_check_branch
      %9 = sbr.rel (0) target = $region5
    $region4: #{tpu_custom_call.1} parent=1 // pred_region
      %s11 = ssub.s32 4096, 4096
      %12 = vsyncadd [#allocation4], %s11
      %s13 = sshll.u32 [#allocation3], 4
      %s14 = int_to_ptr.vmem [resolvable:$true] %s13
      %19 = dma.hbm_to_vmem [thread:$0]  %s0, 4096, %s14, [#allocation4], 256, 256, 16
    $region5: #{tpu_custom_call.1} parent=1 // pred_fallthru
      _
    // Predicated region
    $region6: #{tpu_custom_call.1} parent=1 // pred_check
      _
    $region7: #{tpu_custom_call.1} parent=1 // pred_check_branch
      %21 = sbr.rel (0) target = $region9
    $region8: #{tpu_custom_call.1} parent=1 // pred_region
      %22 = dma.done [#allocation4], 4096
    $region9: #{tpu_custom_call.1} parent=1 // pred_fallthru
      _
    %p23 = scmp.eq.s32.totalorder 0, 0
    // Predicated region
    $region10: #{tpu_custom_call.1} parent=1 // pred_check
      %p24 = pneg %p23
    $region11: #{tpu_custom_call.1} parent=1 // pred_check_branch
      %26 = sbr.rel (%p24) target = $region13
    $region12: #{tpu_custom_call.1} parent=1 // pred_region
      %27 = vst [vmem:[#allocation2] sm:$0xff] 0.0
      %28 = vst [vmem:[#allocation2 + $0x8] sm:$0xff] 0.0
      %29 = vst [vmem:[#allocation2 + $0x10] sm:$0xff] 0.0
      %30 = vst [vmem:[#allocation2 + $0x18] sm:$0xff] 0.0
      %31 = vst [vmem:[#allocation2 + $0x20] sm:$0xff] 0.0
      %32 = vst [vmem:[#allocation2 + $0x28] sm:$0xff] 0.0
      %33 = vst [vmem:[#allocation2 + $0x30] sm:$0xff] 0.0
      %34 = vst [vmem:[#allocation2 + $0x38] sm:$0xff] 0.0
      %35 = vst [vmem:[#allocation2 + $0x40] sm:$0xff] 0.0
      %36 = vst [vmem:[#allocation2 + $0x48] sm:$0xff] 0.0
      %37 = vst [vmem:[#allocation2 + $0x50] sm:$0xff] 0.0
      %38 = vst [vmem:[#allocation2 + $0x58] sm:$0xff] 0.0
      %39 = vst [vmem:[#allocation2 + $0x60] sm:$0xff] 0.0
      %40 = vst [vmem:[#allocation2 + $0x68] sm:$0xff] 0.0
      %41 = vst [vmem:[#allocation2 + $0x70] sm:$0xff] 0.0
      %42 = vst [vmem:[#allocation2 + $0x78] sm:$0xff] 0.0
    $region13: #{tpu_custom_call.1} parent=1 // pred_fallthru
      _
    %v43 = vld [vmem:[#allocation3] sm:$0xff]
    %v44 = vld [vmem:[#allocation3 + $0x8] sm:$0xff]
    %v45 = vld [vmem:[#allocation3 + $0x10] sm:$0xff]
    %v46 = vld [vmem:[#allocation3 + $0x18] sm:$0xff]
    %v47 = vld [vmem:[#allocation3 + $0x20] sm:$0xff]
    %v48 = vld [vmem:[#allocation3 + $0x28] sm:$0xff]
    %v49 = vld [vmem:[#allocation3 + $0x30] sm:$0xff]
    %v50 = vld [vmem:[#allocation3 + $0x38] sm:$0xff]
    %v51 = vld [vmem:[#allocation3 + $0x40] sm:$0xff]
    %v52 = vld [vmem:[#allocation3 + $0x48] sm:$0xff]
    %v53 = vld [vmem:[#allocation3 + $0x50] sm:$0xff]
    %v54 = vld [vmem:[#allocation3 + $0x58] sm:$0xff]
    %v55 = vld [vmem:[#allocation3 + $0x60] sm:$0xff]
    %v56 = vld [vmem:[#allocation3 + $0x68] sm:$0xff]
    %v57 = vld [vmem:[#allocation3 + $0x70] sm:$0xff]
    %v58 = vld [vmem:[#allocation3 + $0x78] sm:$0xff]
    %v59 = vld [vmem:[#allocation3 + $0x80] sm:$0xff]
    %v60 = vld [vmem:[#allocation3 + $0x88] sm:$0xff]
    %v61 = vld [vmem:[#allocation3 + $0x90] sm:$0xff]
    %v62 = vld [vmem:[#allocation3 + $0x98] sm:$0xff]
    %v63 = vld [vmem:[#allocation3 + $0xa0] sm:$0xff]
    %v64 = vld [vmem:[#allocation3 + $0xa8] sm:$0xff]
    %v65 = vld [vmem:[#allocation3 + $0xb0] sm:$0xff]
    %v66 = vld [vmem:[#allocation3 + $0xb8] sm:$0xff]
    %v67 = vld [vmem:[#allocation3 + $0xc0] sm:$0xff]
    %v68 = vld [vmem:[#allocation3 + $0xc8] sm:$0xff]
    %v69 = vld [vmem:[#allocation3 + $0xd0] sm:$0xff]
    %v70 = vld [vmem:[#allocation3 + $0xd8] sm:$0xff]
    %v71 = vld [vmem:[#allocation3 + $0xe0] sm:$0xff]
    %v72 = vld [vmem:[#allocation3 + $0xe8] sm:$0xff]
    %v73 = vld [vmem:[#allocation3 + $0xf0] sm:$0xff]
    %v74 = vld [vmem:[#allocation3 + $0xf8] sm:$0xff]
    %v75 = vld [vmem:[#allocation2] sm:$0xff]
    %v76 = vld [vmem:[#allocation2 + $0x8] sm:$0xff]
    %v77 = vld [vmem:[#allocation2 + $0x10] sm:$0xff]
    %v78 = vld [vmem:[#allocation2 + $0x18] sm:$0xff]
    %v79 = vld [vmem:[#allocation2 + $0x20] sm:$0xff]
    %v80 = vld [vmem:[#allocation2 + $0x28] sm:$0xff]
    %v81 = vld [vmem:[#allocation2 + $0x30] sm:$0xff]
    %v82 = vld [vmem:[#allocation2 + $0x38] sm:$0xff]
    %v83 = vld [vmem:[#allocation2 + $0x40] sm:$0xff]
    %v84 = vld [vmem:[#allocation2 + $0x48] sm:$0xff]
    %v85 = vld [vmem:[#allocation2 + $0x50] sm:$0xff]
    %v86 = vld [vmem:[#allocation2 + $0x58] sm:$0xff]
    %v87 = vld [vmem:[#allocation2 + $0x60] sm:$0xff]
    %v88 = vld [vmem:[#allocation2 + $0x68] sm:$0xff]
    %v89 = vld [vmem:[#allocation2 + $0x70] sm:$0xff]
    %v90 = vld [vmem:[#allocation2 + $0x78] sm:$0xff]
    %91 = vmatprep.subr.mxu0 %v74
    %92 = vmatpush1.xpose.msra.mxu0 %v73
    %93 = vmatprep.subr.mxu0 %v72
    %94 = vmatpush1.xpose.msra.mxu0 %v71
    %95 = vmatprep.subr.mxu0 %v70
    %96 = vmatpush1.xpose.msra.mxu0 %v69
    %97 = vmatprep.subr.mxu0 %v68
    %98 = vmatpush1.xpose.msra.mxu0 %v67
    %99 = vmatprep.subr.mxu0 %v66
    %100 = vmatpush1.xpose.msra.mxu0 %v65
    %101 = vmatprep.subr.mxu0 %v64
    %102 = vmatpush1.xpose.msra.mxu0 %v63
    %103 = vmatprep.subr.mxu0 %v62
    %104 = vmatpush1.xpose.msra.mxu0 %v61
    %105 = vmatprep.subr.mxu0 %v60
    %106 = vmatpush1.xpose.msra.mxu0 %v59
    %107 = vmatprep.subr.mxu0 %v58
    %108 = vmatpush1.xpose.msra.mxu0 %v57
    %109 = vmatprep.subr.mxu0 %v56
    %110 = vmatpush1.xpose.msra.mxu0 %v55
    %111 = vmatprep.subr.mxu0 %v54
    %112 = vmatpush1.xpose.msra.mxu0 %v53
    %113 = vmatprep.subr.mxu0 %v52
    %114 = vmatpush1.xpose.msra.mxu0 %v51
    %115 = vmatprep.subr.mxu0 %v50
    %116 = vmatpush1.xpose.msra.mxu0 %v49
    %117 = vmatprep.subr.mxu0 %v48
    %118 = vmatpush1.xpose.msra.mxu0 %v47
    %119 = vmatprep.subr.mxu0 %v46
    %120 = vmatpush1.xpose.msra.mxu0 %v45
    %121 = vmatprep.subr.mxu0 %v44
    %122 = vmatpush1.xpose.msra.mxu0 %v43
    %123 = vmatprep.subr.mxu0 0.0
    %124 = vmatpush2.xpose.msra.mxu0 0.0
    %125 = vmatprep.subr.mxu0 0.0
    %126 = vmatpush2.xpose.msra.mxu0 0.0
    %127 = vmatprep.subr.mxu0 0.0
    %128 = vmatpush2.xpose.msra.mxu0 0.0
    %129 = vmatprep.subr.mxu0 0.0
    %130 = vmatpush2.xpose.msra.mxu0 0.0
    %131 = vmatprep.subr.mxu0 0.0
    %132 = vmatpush2.xpose.msra.mxu0 0.0
    %133 = vmatprep.subr.mxu0 0.0
    %134 = vmatpush2.xpose.msra.mxu0 0.0
    %135 = vmatprep.subr.mxu0 0.0
    %136 = vmatpush2.xpose.msra.mxu0 0.0
    %137 = vmatprep.subr.mxu0 0.0
    %138 = vmatpush2.xpose.msra.mxu0 0.0
    %139 = vmatprep.subr.mxu0 0.0
    %140 = vmatpush2.xpose.msra.mxu0 0.0
    %141 = vmatprep.subr.mxu0 0.0
    %142 = vmatpush2.xpose.msra.mxu0 0.0
    %143 = vmatprep.subr.mxu0 0.0
    %144 = vmatpush2.xpose.msra.mxu0 0.0
    %145 = vmatprep.subr.mxu0 0.0
    %146 = vmatpush2.xpose.msra.mxu0 0.0
    %147 = vmatprep.subr.mxu0 0.0
    %148 = vmatpush2.xpose.msra.mxu0 0.0
    %149 = vmatprep.subr.mxu0 0.0
    %150 = vmatpush2.xpose.msra.mxu0 0.0
    %151 = vmatprep.subr.mxu0 0.0
    %152 = vmatpush2.xpose.msra.mxu0 0.0
    %153 = vmatprep.subr.mxu0 0.0
    %154 = vmatpush2.xpose.msra.mxu0 0.0
    %155 = vmatprep.mubr.f32.mxu0 %v44
    %156 = vmatmul.mubr.f32.gmra.mxu0 %v43
    %v157 = vpop.f32.mrf.mxu0
    %v158 = vadd.f32 0.0, %v157
    %v159 = vpop.f32.mrf.mxu0
    %160 = vmatprep.mubr.f32.mxu0 %v46
    %161 = vmatmul.mubr.f32.gmra.mxu0 %v45
    %v162 = vpop.f32.mrf.mxu0
    %v163 = vadd.f32 0.0, %v162
    %v164 = vpop.f32.mrf.mxu0
    %165 = vmatprep.mubr.f32.mxu0 %v48
    %166 = vmatmul.mubr.f32.gmra.mxu0 %v47
    %v167 = vpop.f32.mrf.mxu0
    %v168 = vadd.f32 0.0, %v167
    %v169 = vpop.f32.mrf.mxu0
    %170 = vmatprep.mubr.f32.mxu0 %v50
    %171 = vmatmul.mubr.f32.gmra.mxu0 %v49
    %v172 = vpop.f32.mrf.mxu0
    %v173 = vadd.f32 0.0, %v172
    %v174 = vpop.f32.mrf.mxu0
    %175 = vmatprep.mubr.f32.mxu0 %v52
    %176 = vmatmul.mubr.f32.gmra.mxu0 %v51
    %v177 = vpop.f32.mrf.mxu0
    %v178 = vadd.f32 0.0, %v177
    %v179 = vpop.f32.mrf.mxu0
    %180 = vmatprep.mubr.f32.mxu0 %v54
    %181 = vmatmul.mubr.f32.gmra.mxu0 %v53
    %v182 = vpop.f32.mrf.mxu0
    %v183 = vadd.f32 0.0, %v182
    %v184 = vpop.f32.mrf.mxu0
    %185 = vmatprep.mubr.f32.mxu0 %v56
    %186 = vmatmul.mubr.f32.gmra.mxu0 %v55
    %v187 = vpop.f32.mrf.mxu0
    %v188 = vadd.f32 0.0, %v187
    %v189 = vpop.f32.mrf.mxu0
    %190 = vmatprep.mubr.f32.mxu0 %v58
    %191 = vmatmul.mubr.f32.gmra.mxu0 %v57
    %v192 = vpop.f32.mrf.mxu0
    %v193 = vadd.f32 0.0, %v192
    %v194 = vpop.f32.mrf.mxu0
    %195 = vmatprep.mubr.f32.mxu0 %v60
    %196 = vmatmul.mubr.f32.gmra.mxu0 %v59
    %v197 = vpop.f32.mrf.mxu0
    %v198 = vadd.f32 0.0, %v197
    %v199 = vpop.f32.mrf.mxu0
    %200 = vmatprep.mubr.f32.mxu0 %v62
    %201 = vmatmul.mubr.f32.gmra.mxu0 %v61
    %v202 = vpop.f32.mrf.mxu0
    %v203 = vadd.f32 0.0, %v202
    %v204 = vpop.f32.mrf.mxu0
    %205 = vmatprep.mubr.f32.mxu0 %v64
    %206 = vmatmul.mubr.f32.gmra.mxu0 %v63
    %v207 = vpop.f32.mrf.mxu0
    %v208 = vadd.f32 0.0, %v207
    %v209 = vpop.f32.mrf.mxu0
    %210 = vmatprep.mubr.f32.mxu0 %v66
    %211 = vmatmul.mubr.f32.gmra.mxu0 %v65
    %v212 = vpop.f32.mrf.mxu0
    %v213 = vadd.f32 0.0, %v212
    %v214 = vpop.f32.mrf.mxu0
    %215 = vmatprep.mubr.f32.mxu0 %v68
    %216 = vmatmul.mubr.f32.gmra.mxu0 %v67
    %v217 = vpop.f32.mrf.mxu0
    %v218 = vadd.f32 0.0, %v217
    %v219 = vpop.f32.mrf.mxu0
    %220 = vmatprep.mubr.f32.mxu0 %v70
    %221 = vmatmul.mubr.f32.gmra.mxu0 %v69
    %v222 = vpop.f32.mrf.mxu0
    %v223 = vadd.f32 0.0, %v222
    %v224 = vpop.f32.mrf.mxu0
    %225 = vmatprep.mubr.f32.mxu0 %v72
    %226 = vmatmul.mubr.f32.gmra.mxu0 %v71
    %v227 = vpop.f32.mrf.mxu0
    %v228 = vadd.f32 0.0, %v227
    %v229 = vpop.f32.mrf.mxu0
    %230 = vmatprep.mubr.f32.mxu0 %v74
    %231 = vmatmul.mubr.f32.gmra.mxu0 %v73
    %v232 = vpop.f32.mrf.mxu0
    %v233 = vadd.f32 0.0, %v232
    %v234 = vpop.f32.mrf.mxu0
    %235 = vdwg.mxu0
    %v236 = vadd.f32 %v75, %v158
    %v237 = vadd.f32 %v76, %v163
    %v238 = vadd.f32 %v77, %v168
    %v239 = vadd.f32 %v78, %v173
    %v240 = vadd.f32 %v79, %v178
    %v241 = vadd.f32 %v80, %v183
    %v242 = vadd.f32 %v81, %v188
    %v243 = vadd.f32 %v82, %v193
    %v244 = vadd.f32 %v83, %v198
    %v245 = vadd.f32 %v84, %v203
    %v246 = vadd.f32 %v85, %v208
    %v247 = vadd.f32 %v86, %v213
    %v248 = vadd.f32 %v87, %v218
    %v249 = vadd.f32 %v88, %v223
    %v250 = vadd.f32 %v89, %v228
    %v251 = vadd.f32 %v90, %v233
    %252 = vst [vmem:[#allocation2] sm:$0xff] %v236
    %253 = vst [vmem:[#allocation2 + $0x8] sm:$0xff] %v237
    %254 = vst [vmem:[#allocation2 + $0x10] sm:$0xff] %v238
    %255 = vst [vmem:[#allocation2 + $0x18] sm:$0xff] %v239
    %256 = vst [vmem:[#allocation2 + $0x20] sm:$0xff] %v240
    %257 = vst [vmem:[#allocation2 + $0x28] sm:$0xff] %v241
    %258 = vst [vmem:[#allocation2 + $0x30] sm:$0xff] %v242
    %259 = vst [vmem:[#allocation2 + $0x38] sm:$0xff] %v243
    %260 = vst [vmem:[#allocation2 + $0x40] sm:$0xff] %v244
    %261 = vst [vmem:[#allocation2 + $0x48] sm:$0xff] %v245
    %262 = vst [vmem:[#allocation2 + $0x50] sm:$0xff] %v246
    %263 = vst [vmem:[#allocation2 + $0x58] sm:$0xff] %v247
    %264 = vst [vmem:[#allocation2 + $0x60] sm:$0xff] %v248
    %265 = vst [vmem:[#allocation2 + $0x68] sm:$0xff] %v249
    %266 = vst [vmem:[#allocation2 + $0x70] sm:$0xff] %v250
    %267 = vst [vmem:[#allocation2 + $0x78] sm:$0xff] %v251
    // Predicated region
    $region14: #{tpu_custom_call.1} parent=1 // pred_check
      %p268 = pneg %p23
    $region15: #{tpu_custom_call.1} parent=1 // pred_check_branch
      %270 = sbr.rel (%p268) target = $region17
    $region16: #{tpu_custom_call.1} parent=1 // pred_region
      %v271 = vld [vmem:[#allocation2] sm:$0xff]
      %v272 = vld [vmem:[#allocation2 + $0x8] sm:$0xff]
      %v273 = vld [vmem:[#allocation2 + $0x10] sm:$0xff]
      %v274 = vld [vmem:[#allocation2 + $0x18] sm:$0xff]
      %v275 = vld [vmem:[#allocation2 + $0x20] sm:$0xff]
      %v276 = vld [vmem:[#allocation2 + $0x28] sm:$0xff]
      %v277 = vld [vmem:[#allocation2 + $0x30] sm:$0xff]
      %v278 = vld [vmem:[#allocation2 + $0x38] sm:$0xff]
      %v279 = vld [vmem:[#allocation2 + $0x40] sm:$0xff]
      %v280 = vld [vmem:[#allocation2 + $0x48] sm:$0xff]
      %v281 = vld [vmem:[#allocation2 + $0x50] sm:$0xff]
      %v282 = vld [vmem:[#allocation2 + $0x58] sm:$0xff]
      %v283 = vld [vmem:[#allocation2 + $0x60] sm:$0xff]
      %v284 = vld [vmem:[#allocation2 + $0x68] sm:$0xff]
      %v285 = vld [vmem:[#allocation2 + $0x70] sm:$0xff]
      %v286 = vld [vmem:[#allocation2 + $0x78] sm:$0xff]
      %287 = vst [vmem:[#allocation6] sm:$0xff] %v271
      %288 = vst [vmem:[#allocation6 + $0x8] sm:$0xff] %v272
      %289 = vst [vmem:[#allocation6 + $0x10] sm:$0xff] %v273
      %290 = vst [vmem:[#allocation6 + $0x18] sm:$0xff] %v274
      %291 = vst [vmem:[#allocation6 + $0x20] sm:$0xff] %v275
      %292 = vst [vmem:[#allocation6 + $0x28] sm:$0xff] %v276
      %293 = vst [vmem:[#allocation6 + $0x30] sm:$0xff] %v277
      %294 = vst [vmem:[#allocation6 + $0x38] sm:$0xff] %v278
      %295 = vst [vmem:[#allocation6 + $0x40] sm:$0xff] %v279
      %296 = vst [vmem:[#allocation6 + $0x48] sm:$0xff] %v280
      %297 = vst [vmem:[#allocation6 + $0x50] sm:$0xff] %v281
      %298 = vst [vmem:[#allocation6 + $0x58] sm:$0xff] %v282
      %299 = vst [vmem:[#allocation6 + $0x60] sm:$0xff] %v283
      %300 = vst [vmem:[#allocation6 + $0x68] sm:$0xff] %v284
      %301 = vst [vmem:[#allocation6 + $0x70] sm:$0xff] %v285
      %302 = vst [vmem:[#allocation6 + $0x78] sm:$0xff] %v286
    $region17: #{tpu_custom_call.1} parent=1 // pred_fallthru
      _
    // Predicated region
    $region18: #{tpu_custom_call.1} parent=1 // pred_check
      _
    $region19: #{tpu_custom_call.1} parent=1 // pred_check_branch
      %304 = sbr.rel (0) target = $region21
    $region20: #{tpu_custom_call.1} parent=1 // pred_region
      %s306 = ssub.s32 2048, 2048
      %307 = vsyncadd [#allocation5], %s306
      %s308 = sshll.u32 [#allocation6], 4
      %s309 = int_to_ptr.vmem [resolvable:$true] %s308
      %314 = dma.vmem_to_hbm [thread:$0]  %s309, 2048, %s1, [#allocation5], 128, 128, 8
    $region21: #{tpu_custom_call.1} parent=1 // pred_fallthru
      _
    // Predicated region
    $region22: #{tpu_custom_call.1} parent=1 // pred_check
      _
    $region23: #{tpu_custom_call.1} parent=1 // pred_check_branch
      %316 = sbr.rel (0) target = $region25
    $region24: #{tpu_custom_call.1} parent=1 // pred_region
      %317 = dma.done [#allocation5], 2048
    $region25: #{tpu_custom_call.1} parent=1 // pred_fallthru
      _
    %318 = vsyncpa [#allocation4], 1
    %319 = vsyncpa [#allocation5], 1

</llo_original>
